<compile_context>
chip_gen: v6e
topology: v6e:2x2x1
jax: 0.10.0
libtpu: 0.0.40
codegen_flags: <defaults>
</compile_context>

<pallas_src>
import numpy as np
import jax
import jax.numpy as jnp
from jax.experimental import pallas as pl
from jax.experimental.pallas import tpu as pltpu


# ----------------------------------------------------------------------------
# Tiling helpers
# ----------------------------------------------------------------------------
def _round_up(x, m):
    return ((x + m - 1) // m) * m


def _pick_block_rows(n_rows, dim, itemsize, vmem_budget_bytes=8 * 1024 * 1024):
    """Largest row tile such that 2 inputs x 2 pipeline buffers fit the budget.

    The 8 MiB budget is deliberately conservative so the same sizing is safe on
    v5e (16 MiB default scoped VMEM), v6e (32 MiB) and v7x (32 MiB scoped /
    64 MiB physical).  Tiles are multiples of 128 when possible so the
    lane-dense output uses unmasked stores and bf16 (16,128) tiling also fits.
    """
    cap = vmem_budget_bytes // (4 * dim * itemsize)
    if cap >= 128:
        cap = min(1024, (cap // 128) * 128)
        return max(128, min(cap, _round_up(n_rows, 128)))
    cap = max(8, (cap // 8) * 8)
    return min(cap, _round_up(n_rows, 8))


# ----------------------------------------------------------------------------
# Pallas kernel 1: generic per-row cross-entropy (patch tokens, rows flattened)
#   -sum(softmax((t - c) * inv_tt) * log_softmax(s * inv_st))
# ----------------------------------------------------------------------------
def _ce_rows_kernel(temps_ref, t_ref, s_ref, c_ref, o_ref):
    inv_tt = temps_ref[0]
    inv_st = temps_ref[1]

    t = t_ref[...].astype(jnp.float32)          # (block_rows, D)
    s = s_ref[...].astype(jnp.float32)          # (block_rows, D)
    c = c_ref[...].astype(jnp.float32)          # (1, D) broadcast center

    # teacher: centered, temperature-scaled softmax (reciprocal-multiply)
    t_logits = (t - c) * inv_tt
    t_logits = t_logits - jnp.max(t_logits, axis=-1, keepdims=True)
    t_exp = jnp.exp(t_logits)
    t_prob = t_exp * pl.reciprocal(jnp.sum(t_exp, axis=-1, keepdims=True))

    # student: temperature-scaled log-softmax
    s_logits = s * inv_st
    s_logits = s_logits - jnp.max(s_logits, axis=-1, keepdims=True)
    s_lse = jnp.log(jnp.sum(jnp.exp(s_logits), axis=-1, keepdims=True))
    s_logp = s_logits - s_lse

    ce = -jnp.sum(t_prob * s_logp, axis=-1)     # (block_rows,)
    o_ref[...] = ce.reshape(o_ref.shape)        # (1, 1, block_rows)  lane-dense


def ce_loss_rows(teacher, student, center, temps, block_rows):
    """teacher/student: [R, D] with R % block_rows == 0; center [1, D];
    temps [2] = (1/teacher_temp, 1/student_temp).  Returns per-row CE [R]."""
    R, D = teacher.shape
    num_blocks = R // block_rows
    out = pl.pallas_call(
        _ce_rows_kernel,
        out_shape=jax.ShapeDtypeStruct((num_blocks, 1, block_rows), jnp.float32),
        grid_spec=pltpu.PrefetchScalarGridSpec(
            num_scalar_prefetch=0,
            grid=(num_blocks,),
            in_specs=[
                pl.BlockSpec(memory_space=pltpu.MemorySpace.SMEM),   # temps
                pl.BlockSpec((block_rows, D), lambda i: (i, 0)),     # teacher rows
                pl.BlockSpec((block_rows, D), lambda i: (i, 0)),     # student rows
                pl.BlockSpec((1, D), lambda i: (0, 0)),              # center
            ],
            out_specs=pl.BlockSpec((1, 1, block_rows), lambda i: (i, 0, 0)),
        ),
        compiler_params=pltpu.CompilerParams(
            dimension_semantics=("parallel",),
            vmem_limit_bytes=32 * 1024 * 1024,
        ),
    )(temps, teacher, student, center)
    return out.reshape(R)


# ----------------------------------------------------------------------------
# Pallas kernel 2: class-token loss, one call over all student chunks.
# Teacher tile index is constant (stays resident); teacher softmax is computed
# once into a VMEM scratch on the first grid step.
# ----------------------------------------------------------------------------
def _ce_class_kernel(temps_ref, t_ref, s_ref, c_ref, o_ref, tprob_ref):
    @pl.when(pl.program_id(0) == 0)
    def _():
        inv_tt = temps_ref[0]
        t = t_ref[...].astype(jnp.float32)
        c = c_ref[...].astype(jnp.float32)
        t_logits = (t - c) * inv_tt
        t_logits = t_logits - jnp.max(t_logits, axis=-1, keepdims=True)
        t_exp = jnp.exp(t_logits)
        tprob_ref[...] = t_exp * pl.reciprocal(
            jnp.sum(t_exp, axis=-1, keepdims=True))

    inv_st = temps_ref[1]
    s = s_ref[...].astype(jnp.float32) * inv_st
    s = s - jnp.max(s, axis=-1, keepdims=True)
    s_logp = s - jnp.log(jnp.sum(jnp.exp(s), axis=-1, keepdims=True))

    ce = -jnp.sum(tprob_ref[...] * s_logp, axis=-1)   # (bh_pad,)
    o_ref[...] = ce.reshape(o_ref.shape)              # (1, 1, bh_pad)


def ce_loss_class(teacher, student_stack, center, temps, bh_pad, n_cmp):
    """teacher: [bh_pad, D]; student_stack: [n_cmp*bh_pad, D]; returns [n_cmp, bh_pad]."""
    D = teacher.shape[-1]
    out = pl.pallas_call(
        _ce_class_kernel,
        out_shape=jax.ShapeDtypeStruct((n_cmp, 1, bh_pad), jnp.float32),
        grid_spec=pltpu.PrefetchScalarGridSpec(
            num_scalar_prefetch=0,
            grid=(n_cmp,),
            in_specs=[
                pl.BlockSpec(memory_space=pltpu.MemorySpace.SMEM),   # temps
                pl.BlockSpec((bh_pad, D), lambda i: (0, 0)),         # teacher (resident)
                pl.BlockSpec((bh_pad, D), lambda i: (i, 0)),         # student chunk i
                pl.BlockSpec((1, D), lambda i: (0, 0)),              # center
            ],
            out_specs=pl.BlockSpec((1, 1, bh_pad), lambda i: (i, 0, 0)),
            scratch_shapes=[pltpu.VMEM((bh_pad, D), jnp.float32)],   # cached t_prob
        ),
        compiler_params=pltpu.CompilerParams(
            # scratch is initialized under pl.when(i == 0) -> keep sequential
            dimension_semantics=("arbitrary",),
            vmem_limit_bytes=32 * 1024 * 1024,
        ),
    )(temps, teacher, student_stack, center)
    return out.reshape(n_cmp, bh_pad)


# ----------------------------------------------------------------------------
# FSRLoss in JAX (buffers deterministically zero-initialized, as register_buffer)
# ----------------------------------------------------------------------------
class FSRLossPallas:
    def __init__(self, out_dim, warmup_teacher_temp=0.04, teacher_temp=0.07,
                 student_temp=0.1, momentum=0.9, num_gcrops=2, num_lcrops=0,
                 warmup_epochs=None, epochs=None):
        self.student_temp = student_temp
        self.teacher_temp = np.concatenate(
            (np.linspace(warmup_teacher_temp, teacher_temp, warmup_epochs),
             np.ones(epochs - warmup_epochs) * teacher_temp))
        self.momentum = momentum
        self.num_gcrops = num_gcrops
        self.num_lcrops = num_lcrops
        self.class_center = jnp.zeros((1, out_dim), jnp.float32)
        self.patch_center = jnp.zeros((1, 1, out_dim), jnp.float32)
        # TODO(synk): EMA buffer updates are plain attribute mutation (matches
        # the eager PyTorch module); under jit/grad they must be returned as
        # explicit state instead.

    def _temps(self, epoch):
        # Runtime SMEM scalars -> one compiled kernel across all warmup epochs.
        return jnp.array([1.0 / float(self.teacher_temp[epoch]),
                          1.0 / float(self.student_temp)], jnp.float32)

    def __call__(self, teacher_output, student_output, student_output2=None,
                 student_mask=None, epoch=None):
        class_loss = self.forward_class(teacher_output, student_output,
                                        student_output2, epoch)
        patch_loss = self.forward_patch(teacher_output, student_output,
                                        student_mask, epoch)
        return class_loss, patch_loss

    # ---------------- class-token loss ----------------
    def forward_class(self, teacher_output, student_output, student_output2, epoch):
        student_class = student_output[:, 0]                              # [B(+B2), D]
        if student_output2 is not None:
            student_class = jnp.concatenate([student_class, student_output2], axis=0)
        n_chunks = self.num_gcrops + self.num_lcrops
        chunks = jnp.split(student_class, n_chunks, axis=0)

        B = teacher_output.shape[0]
        Bh = B // 2
        teacher_class = teacher_output[:, 0][:Bh]                         # chunk(2)[0]
        D = teacher_class.shape[-1]

        n_cmp = n_chunks - 1
        bh_pad = _round_up(Bh, 8)
        s_stack = jnp.stack(chunks[1:], axis=0)                           # (n_cmp, Bh, D)
        if bh_pad != Bh:
            s_stack = jnp.pad(s_stack, ((0, 0), (0, bh_pad - Bh), (0, 0)))
            teacher_p = jnp.pad(teacher_class, ((0, bh_pad - Bh), (0, 0)))
        else:
            teacher_p = teacher_class
        s_stack = s_stack.reshape(n_cmp * bh_pad, D)

        ce = ce_loss_class(teacher_p, s_stack, self.class_center,
                           self._temps(epoch), bh_pad, n_cmp)             # (n_cmp, bh_pad)
        # equal-sized chunks: (sum of per-chunk means) / n_cmp == mean over valid rows
        total_loss = jnp.mean(ce[:, :Bh])

        # update_class_center (EMA, glue-scale reduction)
        # TODO(synk): multi-host training would need a cross-replica psum here.
        center = jnp.sum(teacher_class, axis=0, keepdims=True) / Bh
        self.class_center = (self.class_center * self.momentum
                             + center * (1.0 - self.momentum))
        return total_loss

    # ---------------- patch-token loss ----------------
    def forward_patch(self, teacher_output, student_output, student_mask, epoch):
        if student_mask is None:
            return jnp.float32(0.0)
        B = student_output.shape[0]
        Bh = B // 2
        student_patch = student_output[Bh:, 1:]                           # chunk(2)[1]
        teacher_patch = teacher_output[Bh:, 1:]
        _, P, D = student_patch.shape
        mask = student_mask[Bh:].astype(jnp.float32).reshape(Bh, -1)      # [Bh, P]

        R = Bh * P
        itemsize = max(jnp.dtype(teacher_patch.dtype).itemsize,
                       jnp.dtype(student_patch.dtype).itemsize)
        block_rows = _pick_block_rows(R, D, itemsize)
        R_pad = _round_up(R, block_rows)

        t_flat = teacher_patch.reshape(R, D)
        s_flat = student_patch.reshape(R, D)
        if R_pad != R:
            t_flat = jnp.pad(t_flat, ((0, R_pad - R), (0, 0)))
            s_flat = jnp.pad(s_flat, ((0, R_pad - R), (0, 0)))

        ce = ce_loss_rows(t_flat, s_flat, self.patch_center.reshape(1, D),
                          self._temps(epoch), block_rows)
        ce = ce[:R].reshape(Bh, P)

        # masked average over tokens, then mean over batch (glue-scale)
        loss = jnp.sum(ce * mask, axis=-1) / jnp.maximum(jnp.sum(mask, axis=-1), 1.0)
        loss = jnp.mean(loss)

        # update_patch_center (EMA)
        center = jnp.sum(jnp.mean(teacher_patch, axis=1, keepdims=True),
                         axis=0, keepdims=True) / Bh
        self.patch_center = (self.patch_center * self.momentum
                             + center * (1.0 - self.momentum))
        return loss


# ----------------------------------------------------------------------------
# Pure-JAX reference (correctness check)
# ----------------------------------------------------------------------------
def _reference(teacher, student, mask, class_center, patch_center,
               ttemp, stemp, num_chunks):
    B = teacher.shape[0]
    Bh = B // 2
    # class loss
    t_cls = teacher[:, 0][:Bh]
    t_prob = jax.nn.softmax((t_cls - class_center) / ttemp, axis=-1)
    s_chunks = jnp.split(student[:, 0] / stemp, num_chunks, axis=0)
    total, terms = 0.0, 0
    for i in range(1, num_chunks):
        l = jnp.sum(-t_prob * jax.nn.log_softmax(s_chunks[i], axis=-1), axis=-1)
        total += jnp.mean(l)
        terms += 1
    class_loss = total / terms
    # patch loss
    t_pat = teacher[Bh:, 1:]
    s_pat = student[Bh:, 1:]
    t_prob_p = jax.nn.softmax((t_pat - patch_center) / ttemp, axis=-1)
    s_logp = jax.nn.log_softmax(s_pat / stemp, axis=-1)
    m = mask[Bh:].astype(jnp.float32).reshape(Bh, -1)
    l = jnp.sum(-t_prob_p * s_logp, axis=-1)
    l = jnp.sum(l * m, axis=-1) / jnp.maximum(jnp.sum(m, axis=-1), 1.0)
    return class_loss, jnp.mean(l)


if __name__ == "__main__":
    key = jax.random.PRNGKey(0)
    B, P, D = 8, 16, 128          # batch (2 global crops => Bh=4), 4x4 patch grid, out_dim
    k1, k2, k3 = jax.random.split(key, 3)
    teacher_output = jax.random.normal(k1, (B, 1 + P, D), jnp.float32)
    student_output = jax.random.normal(k2, (B, 1 + P, D), jnp.float32)
    student_mask = jax.random.bernoulli(k3, 0.5, (B, 4, 4))
    epoch = 2

    loss_mod = FSRLossPallas(out_dim=D, warmup_epochs=5, epochs=10)
    class_loss, patch_loss = loss_mod(teacher_output, student_output,
                                      student_output2=None,
                                      student_mask=student_mask, epoch=epoch)
    jax.block_until_ready((class_loss, patch_loss))

    # correctness check vs plain-JAX reference
    ref_cls, ref_pat = _reference(
        teacher_output, student_output, student_mask,
        jnp.zeros((1, D), jnp.float32), jnp.zeros((1, 1, D), jnp.float32),
        float(loss_mod.teacher_temp[epoch]), loss_mod.student_temp,
        num_chunks=2)
    np.testing.assert_allclose(np.asarray(class_loss), np.asarray(ref_cls),
                               rtol=1e-3, atol=1e-3)
    np.testing.assert_allclose(np.asarray(patch_loss), np.asarray(ref_pat),
                               rtol=1e-3, atol=1e-3)

    print("KERNEL_OK")
</pallas_src>

<mosaic_0001>
module attributes {stable_mosaic.version = 11 : i64} {
  func.func @_ce_class_kernel(%arg0: i32, %arg1: memref<2xf32, #tpu.memory_space<smem>>, %arg2: memref<8x128xf32, #tpu.memory_space<vmem>>, %arg3: memref<8x128xf32, #tpu.memory_space<vmem>>, %arg4: memref<1x128xf32, #tpu.memory_space<vmem>>, %arg5: memref<1x1x8xf32, #tpu.memory_space<vmem>>, %arg6: memref<8x128xf32, #tpu.memory_space<vmem>>) attributes {dimension_semantics = [#tpu.dimension_semantics<arbitrary>], iteration_bounds = array<i64: 1>, scalar_prefetch = 0 : i64, scratch_operands = 1 : i64, tpu.core_type = #tpu.core_type<tc>, window_params = [{transform_indices = @transform_0, window_bounds = array<i64: 2>}, {pipeline_mode = #tpu.pipeline_mode<synchronous>, transform_indices = @transform_1, window_bounds = array<i64: 8, 128>}, {transform_indices = @transform_2, window_bounds = array<i64: 8, 128>}, {pipeline_mode = #tpu.pipeline_mode<synchronous>, transform_indices = @transform_3, window_bounds = array<i64: 1, 128>}, {transform_indices = @transform_4, window_bounds = array<i64: 1, 1, 8>}]} {
    %c0_i32 = arith.constant 0 : i32
    %0 = arith.cmpi eq, %arg0, %c0_i32 : i32
    %1 = arith.extui %0 : i1 to i32
    %c0_i32_0 = arith.constant 0 : i32
    %2 = arith.cmpi ne, %1, %c0_i32_0 : i32
    scf.if %2 {
      %c0_10 = arith.constant 0 : index
      %24 = memref.load %arg1[%c0_10] : memref<2xf32, #tpu.memory_space<smem>>
      %c0_11 = arith.constant 0 : index
      %c0_12 = arith.constant 0 : index
      %25 = vector.load %arg2[%c0_11, %c0_12] : memref<8x128xf32, #tpu.memory_space<vmem>>, vector<8x128xf32>
      %c0_13 = arith.constant 0 : index
      %c0_14 = arith.constant 0 : index
      %26 = vector.load %arg4[%c0_13, %c0_14] : memref<1x128xf32, #tpu.memory_space<vmem>>, vector<1x128xf32>
      %27 = vector.broadcast %26 : vector<1x128xf32> to vector<8x128xf32>
      %28 = arith.subf %25, %27 : vector<8x128xf32>
      %29 = vector.broadcast %24 : f32 to vector<8x128xf32>
      %30 = arith.mulf %28, %29 : vector<8x128xf32>
      %cst_15 = arith.constant dense<0xFF800000> : vector<8xf32>
      %31 = vector.multi_reduction <maximumf>, %30, %cst_15 [1] : vector<8x128xf32> to vector<8xf32>
      %32 = vector.shape_cast %31 : vector<8xf32> to vector<8x1xf32>
      %33 = vector.broadcast %32 : vector<8x1xf32> to vector<8x128xf32>
      %34 = arith.subf %30, %33 : vector<8x128xf32>
      %35 = math.exp %34 : vector<8x128xf32>
      %cst_16 = arith.constant dense<0.000000e+00> : vector<8xf32>
      %36 = vector.multi_reduction <add>, %35, %cst_16 [1] : vector<8x128xf32> to vector<8xf32>
      %37 = vector.shape_cast %36 : vector<8xf32> to vector<8x1xf32>
      %38 = tpu.reciprocal %37 : vector<8x1xf32> -> vector<8x1xf32>
      %39 = vector.broadcast %38 : vector<8x1xf32> to vector<8x128xf32>
      %40 = arith.mulf %35, %39 : vector<8x128xf32>
      %c0_17 = arith.constant 0 : index
      %c0_18 = arith.constant 0 : index
      %41 = vector.load %arg6[%c0_17, %c0_18] : memref<8x128xf32, #tpu.memory_space<vmem>>, vector<8x128xf32>
      tpu.vector_store %arg6[%c0_17, %c0_18], %40 {strides = array<i32>} : memref<8x128xf32, #tpu.memory_space<vmem>>, vector<8x128xf32>,
    } else {
    }
    %c1 = arith.constant 1 : index
    %3 = memref.load %arg1[%c1] : memref<2xf32, #tpu.memory_space<smem>>
    %c0 = arith.constant 0 : index
    %c0_1 = arith.constant 0 : index
    %4 = vector.load %arg3[%c0, %c0_1] : memref<8x128xf32, #tpu.memory_space<vmem>>, vector<8x128xf32>
    %5 = vector.broadcast %3 : f32 to vector<8x128xf32>
    %6 = arith.mulf %4, %5 : vector<8x128xf32>
    %cst = arith.constant dense<0xFF800000> : vector<8xf32>
    %7 = vector.multi_reduction <maximumf>, %6, %cst [1] : vector<8x128xf32> to vector<8xf32>
    %8 = vector.shape_cast %7 : vector<8xf32> to vector<8x1xf32>
    %9 = vector.broadcast %8 : vector<8x1xf32> to vector<8x128xf32>
    %10 = arith.subf %6, %9 : vector<8x128xf32>
    %11 = math.exp %10 : vector<8x128xf32>
    %cst_2 = arith.constant dense<0.000000e+00> : vector<8xf32>
    %12 = vector.multi_reduction <add>, %11, %cst_2 [1] : vector<8x128xf32> to vector<8xf32>
    %13 = vector.shape_cast %12 : vector<8xf32> to vector<8x1xf32>
    %14 = math.log %13 : vector<8x1xf32>
    %15 = vector.broadcast %14 : vector<8x1xf32> to vector<8x128xf32>
    %16 = arith.subf %10, %15 : vector<8x128xf32>
    %c0_3 = arith.constant 0 : index
    %c0_4 = arith.constant 0 : index
    %17 = vector.load %arg6[%c0_3, %c0_4] : memref<8x128xf32, #tpu.memory_space<vmem>>, vector<8x128xf32>
    %18 = arith.mulf %17, %16 : vector<8x128xf32>
    %cst_5 = arith.constant dense<0.000000e+00> : vector<8xf32>
    %19 = vector.multi_reduction <add>, %18, %cst_5 [1] : vector<8x128xf32> to vector<8xf32>
    %cst_6 = arith.constant 0.000000e+00 : f32
    %20 = vector.broadcast %cst_6 : f32 to vector<8xf32>
    %21 = arith.subf %20, %19 : vector<8xf32>
    %22 = vector.shape_cast %21 : vector<8xf32> to vector<1x1x8xf32>
    %c0_7 = arith.constant 0 : index
    %c0_8 = arith.constant 0 : index
    %c0_9 = arith.constant 0 : index
    %23 = vector.load %arg5[%c0_7, %c0_8, %c0_9] : memref<1x1x8xf32, #tpu.memory_space<vmem>>, vector<1x1x8xf32>
    tpu.vector_store %arg5[%c0_7, %c0_8, %c0_9], %22 {strides = array<i32>} : memref<1x1x8xf32, #tpu.memory_space<vmem>>, vector<1x1x8xf32>,
    return
  }
  func.func @transform_0(%arg0: i32) -> i32 {
    %c0_i32 = arith.constant 0 : i32
    %c0_i32_0 = arith.constant 0 : i32
    return %c0_i32 : i32
  }
  func.func @transform_1(%arg0: i32) -> (i32, i32) {
    %c0_i32 = arith.constant 0 : i32
    %c0_i32_0 = arith.constant 0 : i32
    %c0_i32_1 = arith.constant 0 : i32
    return %c0_i32, %c0_i32_0 : i32, i32
  }
  func.func @transform_2(%arg0: i32) -> (i32, i32) {
    %c0_i32 = arith.constant 0 : i32
    %c0_i32_0 = arith.constant 0 : i32
    return %arg0, %c0_i32 : i32, i32
  }
  func.func @transform_3(%arg0: i32) -> (i32, i32) {
    %c0_i32 = arith.constant 0 : i32
    %c0_i32_0 = arith.constant 0 : i32
    %c0_i32_1 = arith.constant 0 : i32
    return %c0_i32, %c0_i32_0 : i32, i32
  }
  func.func @transform_4(%arg0: i32) -> (i32, i32, i32) {
    %c0_i32 = arith.constant 0 : i32
    %c0_i32_0 = arith.constant 0 : i32
    %c0_i32_1 = arith.constant 0 : i32
    return %arg0, %c0_i32, %c0_i32_0 : i32, i32, i32
  }
}

</mosaic_0001>

<llo_original>
// kernel: tpu_custom_call.1
$region0: #{tpu_custom_call.1}
  #allocation0 [shape = 'u32[]', space=smem, size = 0x4, offset = 0x4, fixed_abs, tag = 'smem constant byte address 0x4 - core index']
  #allocation1 [shape = 'u32[144,128]{1,0:T(1,128)}', space=vmem, size = 0x12000, scoped, tag = 'internal scratch']
  #allocation2 [shape = 'f32[8,128]{1,0:T(8,128)}', space=vmem, size = 0x1000, scoped, tag = 'scratch operand']
  %s0 = inlined_call_operand.hbm [shape: f32[2], index: 0, kind: input, shape index: {}]
  %s1 = inlined_call_operand.hbm [shape: f32[8,128], index: 1, kind: input, shape index: {}]
  %s2 = inlined_call_operand.hbm [shape: f32[8,128], index: 2, kind: input, shape index: {}]
  %s3 = inlined_call_operand.vmem [shape: f32[1,128], index: 3, kind: input, shape index: {}]
  %s4 = inlined_call_operand.hbm [shape: f32[1,1,8], index: 4, kind: output, shape index: {}]
  %s5 = sld [smem:[#allocation0]]
  $region42: #{tpu_custom_call.1} parent=0
    _
  %s7 = ssub.s32 1, %s5
  %s8 = scalar_select 0, %s7, %s5
  $region1: #{tpu_custom_call.1} parent=0
    #allocation3 [shape = 'u8[512]{0}', space=smem, size = 0x200, scoped, tag = 'input window, operand 0, single buffered']
    #allocation4 [shape = 's32[1]{0}', space=sflag, size = 0x4, scoped, tag = 'scoped memory for tpu_custom_call.1']
    #allocation5 [shape = 's32[1]{0}', space=sflag, size = 0x4, scoped, tag = 'scoped memory for tpu_custom_call.1']
    #allocation6 [shape = 's32[1]{0}', space=sflag, size = 0x4, scoped, tag = 'scoped memory for tpu_custom_call.1']
    #allocation7 [shape = 'u8[4096]{0}', space=vmem, size = 0x1000, scoped, tag = 'input window, operand 1, single buffered']
    #allocation8 [shape = 'u8[4096]{0}', space=vmem, size = 0x1000, scoped, tag = 'input window, operand 2, single buffered']
    #allocation9 [shape = 's32[1]{0}', space=sflag, size = 0x4, scoped, tag = 'scoped memory for tpu_custom_call.1']
    #allocation10 [shape = 'u8[512]{0}', space=vmem, size = 0x400, scoped, tag = 'output window, operand 0, single buffered']
    %9 = vsyncpa [#allocation6], 0
    %10 = vsyncpa [#allocation4], 0
    %11 = vsyncpa [#allocation9], 0
    %12 = vsyncpa [#allocation5], 0
    // Predicated region
    $region2: #{tpu_custom_call.1} parent=1 // pred_check
      _
    $region3: #{tpu_custom_call.1} parent=1 // pred_check_branch
      %14 = sbr.rel (0) target = $region5
    $region4: #{tpu_custom_call.1} parent=1 // pred_region
      %s16 = ssub.s32 16, 16
      %17 = vsyncadd [#allocation6], %s16
      %20 = dma.hbm_to_smem %s0, 16, [#allocation3], [#allocation6]
    $region5: #{tpu_custom_call.1} parent=1 // pred_fallthru
      _
    // Predicated region
    $region6: #{tpu_custom_call.1} parent=1 // pred_check
      _
    $region7: #{tpu_custom_call.1} parent=1 // pred_check_branch
      %22 = sbr.rel (0) target = $region9
    $region8: #{tpu_custom_call.1} parent=1 // pred_region
      %s24 = ssub.s32 128, 128
      %25 = vsyncadd [#allocation4], %s24
      %s27 = sshll.u32 [#allocation7], 4
      %s28 = int_to_ptr.vmem [resolvable:$true] %s27
      %30 = dma.hbm_to_vmem [thread:$0]  %s1, 128, %s28, [#allocation4]
    $region9: #{tpu_custom_call.1} parent=1 // pred_fallthru
      _
    // Predicated region
    $region10: #{tpu_custom_call.1} parent=1 // pred_check
      _
    $region11: #{tpu_custom_call.1} parent=1 // pred_check_branch
      %32 = sbr.rel (0) target = $region13
    $region12: #{tpu_custom_call.1} parent=1 // pred_region
      %s34 = ssub.s32 128, 128
      %35 = vsyncadd [#allocation9], %s34
      %s37 = sshll.u32 [#allocation8], 4
      %s38 = int_to_ptr.vmem [resolvable:$true] %s37
      %40 = dma.hbm_to_vmem [thread:$0]  %s2, 128, %s38, [#allocation9]
    $region13: #{tpu_custom_call.1} parent=1 // pred_fallthru
      _
    // Predicated region
    $region14: #{tpu_custom_call.1} parent=1 // pred_check
      _
    $region15: #{tpu_custom_call.1} parent=1 // pred_check_branch
      %42 = sbr.rel (0) target = $region17
    $region16: #{tpu_custom_call.1} parent=1 // pred_region
      _
    $region17: #{tpu_custom_call.1} parent=1 // pred_fallthru
      _
    // Predicated region
    $region18: #{tpu_custom_call.1} parent=1 // pred_check
      _
    $region19: #{tpu_custom_call.1} parent=1 // pred_check_branch
      %44 = sbr.rel (0) target = $region21
    $region20: #{tpu_custom_call.1} parent=1 // pred_region
      %45 = dma.done [#allocation6], 16
    $region21: #{tpu_custom_call.1} parent=1 // pred_fallthru
      _
    // Predicated region
    $region22: #{tpu_custom_call.1} parent=1 // pred_check
      _
    $region23: #{tpu_custom_call.1} parent=1 // pred_check_branch
      %47 = sbr.rel (0) target = $region25
    $region24: #{tpu_custom_call.1} parent=1 // pred_region
      %48 = dma.done [#allocation4], 128
    $region25: #{tpu_custom_call.1} parent=1 // pred_fallthru
      _
    // Predicated region
    $region26: #{tpu_custom_call.1} parent=1 // pred_check
      _
    $region27: #{tpu_custom_call.1} parent=1 // pred_check_branch
      %50 = sbr.rel (0) target = $region29
    $region28: #{tpu_custom_call.1} parent=1 // pred_region
      %51 = dma.done [#allocation9], 128
    $region29: #{tpu_custom_call.1} parent=1 // pred_fallthru
      _
    %52 = sfence
    %p53 = scmp.eq.s32.totalorder 0, 0
    // Predicated region
    $region30: #{tpu_custom_call.1} parent=1 // pred_check
      %p54 = pneg %p53
    $region31: #{tpu_custom_call.1} parent=1 // pred_check_branch
      %56 = sbr.rel (%p54) target = $region33
    $region32: #{tpu_custom_call.1} parent=1 // pred_region
      %s57 = sld [smem:[#allocation3]]
      %v58 = vld [vmem:[#allocation7] sm:$0xff]
      %v59 = vld [vmem:[%s3] sm:$0x1]
      %v61 = vlaneseq
      %v62 = vshrl.u32 %v61, 7
      %v63 = vsub.s32 0, %v62
      %v64 = vrot.slane %v59, %v63
      %v66 = vsub.f32 %v58, %v64
      %v67 = vstv %s57
      %v68 = vmul.f32 %v66, %v67
      %69 = vmax.xlane.f32.xlu0 %v68
      %v70 = vpop.xlane.xlu0 %69
      %v71 = vsub.f32 %v68, %v70
      %v72 = vmul.f32 %v71, 1.442695
      %v73 = vpow.pop %v72
      %74 = vadd.xlane.f32.xlu0 %v73
      %v75 = vpop.xlane.xlu0 %74
      %v76 = vrcp.pop %v75
      %v77 = vmul.f32 %v73, %v76
      %78 = vst [vmem:[#allocation2] sm:$0xff] %v77
    $region33: #{tpu_custom_call.1} parent=1 // pred_fallthru
      _
    %s79 = sld [smem:[#allocation3 + $0x1]]
    %v80 = vld [vmem:[#allocation8] sm:$0xff]
    %v81 = vstv %s79
    %v82 = vmul.f32 %v80, %v81
    %83 = vmax.xlane.f32.xlu0 %v82
    %v84 = vpop.xlane.xlu0 %83
    %v85 = vsub.f32 %v82, %v84
    %v86 = vmul.f32 %v85, 1.442695
    %v87 = vpow.pop %v86
    %88 = vadd.xlane.f32.xlu0 %v87
    %v89 = vpop.xlane.xlu0 %88
    %v90 = vlog2.pop %v89
    %v91 = vmul.f32 %v90, 0.6931472
    %v92 = vsub.f32 %v85, %v91
    %v93 = vld [vmem:[#allocation2] sm:$0xff]
    %v94 = vmul.f32 %v93, %v92
    %95 = vadd.xlane.f32.xlu0 %v94
    %v96 = vpop.xlane.xlu0 %95
    %v97 = vsub.f32 0.0, %v96
    %v99 = vlaneseq
    %v100 = vand.u32 %v99, 127
    %v101 = vlaneseq
    %v102 = vshrl.u32 %v101, 7
    %v103 = vsub.s32 %v100, %v102
    %v104 = vrot.slane %v97, %v103
    %vm106 = vcmask 57344
    %107 = vst.msk [vmem:[#allocation10] sm:$0x1] %vm106, %v104
    // Predicated region
    $region34: #{tpu_custom_call.1} parent=1 // pred_check
      _
    $region35: #{tpu_custom_call.1} parent=1 // pred_check_branch
      %109 = sbr.rel (0) target = $region37
    $region36: #{tpu_custom_call.1} parent=1 // pred_region
      %s111 = ssub.s32 16, 16
      %112 = vsyncadd [#allocation5], %s111
      %s114 = sshll.u32 [#allocation10], 4
      %s115 = int_to_ptr.vmem [resolvable:$true] %s114
      %117 = dma.vmem_to_hbm [thread:$0]  %s115, 16, %s4, [#allocation5]
    $region37: #{tpu_custom_call.1} parent=1 // pred_fallthru
      _
    // Predicated region
    $region38: #{tpu_custom_call.1} parent=1 // pred_check
      _
    $region39: #{tpu_custom_call.1} parent=1 // pred_check_branch
      %119 = sbr.rel (0) target = $region41
    $region40: #{tpu_custom_call.1} parent=1 // pred_region
      %120 = dma.done [#allocation5], 16
    $region41: #{tpu_custom_call.1} parent=1 // pred_fallthru
      _
    %121 = vsyncpa [#allocation4], 1
    %122 = vsyncpa [#allocation9], 1
    %123 = vsyncpa [#allocation5], 1
    %124 = vsyncpa [#allocation6], 1

</llo_original>
